<compile_context>
chip_gen: v7x
topology: tpu7x:2x2x1
jax: 0.10.0
libtpu: 0.0.40
codegen_flags: <defaults>
</compile_context>

<pallas_src>
import jax
import jax.numpy as jnp
from jax.experimental import pallas as pl
from jax.experimental.pallas import tpu as pltpu


# 32 MiB scoped-VMEM budget: <= half of v7x's 64 MiB physical VMEM and far
# below v5e/v6e's 128 MiB, so one constant is safe on all three generations.
_VMEM_BUDGET_BYTES = 32 * 1024 * 1024


def _round_up(x, m):
    return ((x + m - 1) // m) * m


def _round_down(x, m):
    return max(m, (x // m) * m)


def _choose_tile_n(n_ent, k_dim, table_bytes_per_elem, batch,
                   vmem_budget_bytes=_VMEM_BUDGET_BYTES,
                   target_step_bytes=1 << 20,
                   min_grid_steps=4):
    """Entity-axis tile width: lane-dense multiple of 128, ~1 MiB of table per
    grid step, and at least `min_grid_steps` steps when N_ent allows it."""
    # ~1 MiB of table per step.
    tile = _round_down(max(128, target_step_bytes // (k_dim * table_bytes_per_elem)), 128)
    # Keep >= min_grid_steps grid steps (pipelining overlap + megacore sharding)
    # whenever the entity axis is large enough for that to make sense.
    if n_ent >= min_grid_steps * 128:
        tile = min(tile, _round_up(max(1, n_ent // min_grid_steps), 128))
    else:
        tile = 128
    # VMEM cap: double-buffered table tile + double-buffered f32 output tile
    # must fit comfortably inside the budget (resident c block is tiny).
    while tile > 128 and (2 * tile * k_dim * table_bytes_per_elem
                          + 2 * tile * batch * 4) > vmem_budget_bytes // 2:
        tile -= 128
    return max(128, tile)


# ---------------------------------------------------------------------------
# One-time parameter preparation (do NOT redo per forward call)
# ---------------------------------------------------------------------------
def prepare_complex_tables(params, batch, compute_dtype=jnp.bfloat16):
    """Build the concatenated, transposed, padded, bf16 entity table once."""
    Er = params["emb_e_real"]        # (N_ent, D) f32
    Ei = params["emb_e_img"]         # (N_ent, D) f32
    n_ent, d = Er.shape
    k_dim = 2 * d
    itemsize = jnp.dtype(compute_dtype).itemsize

    tile_n = _choose_tile_n(n_ent, k_dim, itemsize, batch)
    padded_n = pl.cdiv(n_ent, tile_n) * tile_n

    # (2D, N_ent): entity axis on the 128-wide lane dim (lane-dense tiles).
    table_t = jnp.concatenate([Er, Ei], axis=1).T.astype(compute_dtype)
    if padded_n != n_ent:
        table_t = jnp.pad(table_t, ((0, 0), (0, padded_n - n_ent)))

    return {
        "ent_table_t": table_t,      # (2D, padded_N) bf16
        "tile_n": tile_n,
        "n_ent": n_ent,
        "compute_dtype": compute_dtype,
    }


# ---------------------------------------------------------------------------
# Pallas kernel: one fused matmul + sigmoid per entity tile
# ---------------------------------------------------------------------------
def _complex_kernel(c_ref, tab_ref, out_ref):
    # c   : (B, 2D)        resident across the grid (bf16)
    # tab : (2D, tile_n)   lane-dense tile of the concatenated entity table (bf16)
    # out : (B, tile_n)    f32
    s = jnp.dot(c_ref[...], tab_ref[...], preferred_element_type=jnp.float32)
    out_ref[...] = jax.nn.sigmoid(s).astype(out_ref.dtype)


def complex_forward(e1, rel, params, prepared):
    """ComplEx forward: pred = sigmoid(score(e1, rel, all entities)), (B, N_ent)."""
    B = e1.shape[0]

    # --- glue: embedding lookups (nn.Embedding equivalent; dropout = identity) ---
    er = params["emb_e_real"][e1]      # (B, D) f32
    ei = params["emb_e_img"][e1]       # (B, D) f32
    rr = params["emb_rel_real"][rel]   # (B, D) f32
    ri = params["emb_rel_img"][rel]    # (B, D) f32

    # Loop-invariant complex products, computed once in f32 (cancellation-safe),
    # THEN cast to the streaming dtype.
    a = er * rr - ei * ri              # (B, D) f32
    b = er * ri + ei * rr              # (B, D) f32
    c = jnp.concatenate([a, b], axis=1).astype(prepared["compute_dtype"])  # (B, 2D)

    table_t = prepared["ent_table_t"]  # (2D, padded_N) bf16
    k_dim, padded_n = table_t.shape
    tile_n = prepared["tile_n"]
    n_ent = prepared["n_ent"]
    grid = (padded_n // tile_n,)

    vec_spec = pl.BlockSpec((B, k_dim), lambda j: (0, 0))          # resident (B, 2D)
    if grid[0] >= 4:
        # Deep grid: triple-buffer the table stream to hide DMA issue latency
        # (mainly helps v7x's 3.2 TB/s HBM where per-step DMA time is short).
        tbl_spec = pl.BlockSpec((k_dim, tile_n), lambda j: (0, j),
                                pipeline_mode=pl.Buffered(3))
    else:
        tbl_spec = pl.BlockSpec((k_dim, tile_n), lambda j: (0, j))
    out_spec = pl.BlockSpec((B, tile_n), lambda j: (0, j))

    pred = pl.pallas_call(
        _complex_kernel,
        out_shape=jax.ShapeDtypeStruct((B, padded_n), jnp.float32),
        grid_spec=pltpu.PrefetchScalarGridSpec(
            num_scalar_prefetch=0,
            grid=grid,
            in_specs=[vec_spec, tbl_spec],
            out_specs=out_spec,
        ),
        compiler_params=pltpu.CompilerParams(
            dimension_semantics=("parallel",),           # megacore-shard entity tiles
            vmem_limit_bytes=_VMEM_BUDGET_BYTES,         # match the tile-chooser budget
        ),
    )(c, table_t)

    if padded_n != n_ent:
        pred = pred[:, :n_ent]   # drop padded entity columns (they are sigmoid(0)=0.5)
    return pred


# ---------------------------------------------------------------------------
# Deterministic parameter init (xavier_normal_ analogue, padding_idx=0 zeroed)
# ---------------------------------------------------------------------------
def init_params(key, num_entities, num_relations, embedding_dim):
    def xavier_normal(k, shape):
        fan_in, fan_out = shape[1], shape[0]
        std = (2.0 / (fan_in + fan_out)) ** 0.5
        w = jax.random.normal(k, shape, dtype=jnp.float32) * std
        return w.at[0].set(0.0)  # padding_idx=0

    k1, k2, k3, k4 = jax.random.split(key, 4)
    return {
        "emb_e_real": xavier_normal(k1, (num_entities, embedding_dim)),
        "emb_e_img": xavier_normal(k2, (num_entities, embedding_dim)),
        "emb_rel_real": xavier_normal(k3, (num_relations, embedding_dim)),
        "emb_rel_img": xavier_normal(k4, (num_relations, embedding_dim)),
    }


# ---------------------------------------------------------------------------
def _reference(e1, rel, params):
    er = params["emb_e_real"][e1]
    ei = params["emb_e_img"][e1]
    rr = params["emb_rel_real"][rel]
    ri = params["emb_rel_img"][rel]
    Er = params["emb_e_real"]
    Ei = params["emb_e_img"]
    pred = ((er * rr) @ Er.T + (er * ri) @ Ei.T
            + (ei * rr) @ Ei.T - (ei * ri) @ Er.T)
    return jax.nn.sigmoid(pred)


if __name__ == "__main__":
    # Small shapes consistent with the module: Config.batch_size=8,
    # Config.embedding_dim=32, num_entities=256, num_relations=16.
    NUM_ENTITIES = 256
    NUM_RELATIONS = 16
    EMBED_DIM = 32
    BATCH = 8

    key = jax.random.PRNGKey(0)
    kp, ke, kr = jax.random.split(key, 3)

    params = init_params(kp, NUM_ENTITIES, NUM_RELATIONS, EMBED_DIM)
    # One-time table prep (concat + transpose + bf16 cast + pad), reused per call.
    prepared = prepare_complex_tables(params, batch=BATCH)

    e1 = jax.random.randint(ke, (BATCH,), 0, NUM_ENTITIES, dtype=jnp.int32)
    rel = jax.random.randint(kr, (BATCH,), 0, NUM_RELATIONS, dtype=jnp.int32)

    pred = complex_forward(e1, rel, params, prepared)
    pred = jax.block_until_ready(pred)

    ref = _reference(e1, rel, params)
    assert pred.shape == (BATCH, NUM_ENTITIES)
    # bf16 table streaming: f32-accumulated, expected error ~1e-4 on sigmoid outputs.
    assert jnp.allclose(pred, ref, atol=2e-3, rtol=2e-3)

    print("KERNEL_OK")
</pallas_src>

<mosaic_0001>
module attributes {stable_mosaic.version = 11 : i64} {
  func.func @_complex_kernel(%arg0: i32, %arg1: memref<8x64xbf16, #tpu.memory_space<vmem>>, %arg2: memref<64x128xbf16, #tpu.memory_space<vmem>>, %arg3: memref<8x128xf32, #tpu.memory_space<vmem>>) attributes {dimension_semantics = [#tpu.dimension_semantics<parallel>], iteration_bounds = array<i64: 2>, scalar_prefetch = 0 : i64, scratch_operands = 0 : i64, tpu.core_type = #tpu.core_type<tc>, window_params = [{pipeline_mode = #tpu.pipeline_mode<synchronous>, transform_indices = @transform_0, window_bounds = array<i64: 8, 64>}, {transform_indices = @transform_1, window_bounds = array<i64: 64, 128>}, {transform_indices = @transform_2, window_bounds = array<i64: 8, 128>}]} {
    %c0 = arith.constant 0 : index
    %c0_0 = arith.constant 0 : index
    %0 = vector.load %arg1[%c0, %c0_0] : memref<8x64xbf16, #tpu.memory_space<vmem>>, vector<8x64xbf16>
    %c0_1 = arith.constant 0 : index
    %c0_2 = arith.constant 0 : index
    %1 = vector.load %arg2[%c0_1, %c0_2] : memref<64x128xbf16, #tpu.memory_space<vmem>>, vector<64x128xbf16>
    %cst = arith.constant dense<0.000000e+00> : vector<8x128xf32>
    %2 = tpu.matmul %0, %1, %cst {dimension_numbers = #tpu.dot_dimension_numbers<[1], [0], [0], [1], [0, 0, 1, 1], [], []>} : vector<8x64xbf16>, vector<64x128xbf16>, vector<8x128xf32> -> vector<8x128xf32>
    %3 = arith.negf %2 : vector<8x128xf32>
    %4 = math.exp %3 : vector<8x128xf32>
    %cst_3 = arith.constant 1.000000e+00 : f32
    %5 = vector.broadcast %cst_3 : f32 to vector<8x128xf32>
    %6 = arith.addf %5, %4 : vector<8x128xf32>
    %7 = arith.divf %5, %6 : vector<8x128xf32>
    %c0_4 = arith.constant 0 : index
    %c0_5 = arith.constant 0 : index
    %8 = vector.load %arg3[%c0_4, %c0_5] : memref<8x128xf32, #tpu.memory_space<vmem>>, vector<8x128xf32>
    tpu.vector_store %arg3[%c0_4, %c0_5], %7 {strides = array<i32>} : memref<8x128xf32, #tpu.memory_space<vmem>>, vector<8x128xf32>,
    return
  }
  func.func @transform_0(%arg0: i32) -> (i32, i32) {
    %c0_i32 = arith.constant 0 : i32
    %c0_i32_0 = arith.constant 0 : i32
    %c0_i32_1 = arith.constant 0 : i32
    return %c0_i32, %c0_i32_0 : i32, i32
  }
  func.func @transform_1(%arg0: i32) -> (i32, i32) {
    %c0_i32 = arith.constant 0 : i32
    %c0_i32_0 = arith.constant 0 : i32
    return %c0_i32, %arg0 : i32, i32
  }
  func.func @transform_2(%arg0: i32) -> (i32, i32) {
    %c0_i32 = arith.constant 0 : i32
    %c0_i32_0 = arith.constant 0 : i32
    return %c0_i32, %arg0 : i32, i32
  }
}

</mosaic_0001>

<llo_original>
// kernel: tpu_custom_call.1
$region0: #{tpu_custom_call.1}
  #allocation0 [shape = 'u32[]', space=smem, size = 0x4, offset = 0x4, fixed_abs, tag = 'smem constant byte address 0x4 - core index']
  #allocation1 [shape = 'u32[144,128]{1,0:T(1,128)}', space=vmem, size = 0x12000, scoped, tag = 'internal scratch']
  %s0 = inlined_call_operand.hbm [shape: bf16[8,64], index: 0, kind: input, shape index: {}]
  %s1 = inlined_call_operand.hbm [shape: bf16[64,256], index: 1, kind: input, shape index: {}]
  %s2 = inlined_call_operand.hbm [shape: f32[8,256], index: 2, kind: output, shape index: {}]
  %s3 = sld [smem:[#allocation0]]
  $region49: #{tpu_custom_call.1} parent=0
    _
  %s5 = ssub.s32 1, %s3
  %s6 = scalar_select 0, %s5, %s3
  $region1: #{tpu_custom_call.1} parent=0
    #allocation2 [shape = 'u8[2048]{0}', space=vmem, size = 0x800, scoped, tag = 'input window, operand 0, single buffered']
    #allocation3 [shape = 's32[2]{0}', space=sflag, size = 0x8, scoped, tag = 'scoped memory for tpu_custom_call.1']
    #allocation4 [shape = 's32[2]{0}', space=sflag, size = 0x8, scoped, tag = 'scoped memory for tpu_custom_call.1']
    #allocation5 [shape = 'u8[32768]{0}', space=vmem, size = 0x8000, scoped, tag = 'input window, operand 1']
    #allocation6 [shape = 's32[2]{0}', space=sflag, size = 0x8, scoped, tag = 'scoped memory for tpu_custom_call.1']
    #allocation7 [shape = 'u8[8192]{0}', space=vmem, size = 0x2000, scoped, tag = 'output window, operand 0']
    %7 = vsyncpa [#allocation3], 0
    %8 = vsyncpa [#allocation6], 0
    %s9 = scalar_lea.sflag [#allocation6], 1
    %10 = vsyncpa %s9, 0
    %11 = vsyncpa [#allocation4], 0
    %s12 = scalar_lea.sflag [#allocation4], 1
    %13 = vsyncpa %s12, 0
    loop: start=0, step=1, limit=4
    $region2: #{tpu_custom_call.1} parent=1 // loop_pre_header
      _
    $region3: #{tpu_custom_call.1} parent=1 // loop_header
      %s15 = sphi 0, %s19
      %p16 = scmp.ge.s32.totalorder %s15, 4
      %s23 = sphi 0, %s23
      %s25 = sphi 0, %s23
      %s26 = sphi 0, %s25
      %s40 = sphi 0, %s26
      %s46 = sphi 0, %s48
      %s49 = sphi 0, %s46
      %s50 = sphi 0, %s49
      %s66 = sphi 0, %s50
      %s72 = sphi 0, %s74
      %s75 = sphi 0, %s72
      %s76 = sphi 0, %s75
      %s92 = sphi 0, %s76
    $region4: #{tpu_custom_call.1} parent=1 // loop_header_branch
      %18 = sbr.rel (%p16) target = $region8
    $region5: #{tpu_custom_call.1} parent=1 // loop_body
      %s20 = ssub.s32 %s15, 1
      %s21 = ssub.s32 %s15, 2
      %s22 = sadd.s32 %s15, 1
      %s24 = sadd.s32 %s23, 1
      %p27 = scmp.eq.s32.totalorder %s15, 1
      %p28 = scmp.ne.s32.totalorder %s23, %s25
      %p29 = scmp.eq.s32.totalorder %s15, 0
      %p30 = por %p28, %p29
      %p31 = scmp.ne.s32.totalorder %s23, %s25
      %p32 = scmp.eq.s32.totalorder %s20, 1
      %p33 = por %p31, %p32
      %p34 = scmp.ne.s32.totalorder %s25, %s26
      %p35 = scmp.eq.s32.totalorder %s20, 0
      %p36 = por %p34, %p35
      %p37 = scmp.ne.s32.totalorder %s25, %s26
      %p38 = scmp.eq.s32.totalorder %s21, 1
      %p39 = por %p37, %p38
      %p41 = scmp.ne.s32.totalorder %s26, %s40
      %p42 = scmp.eq.s32.totalorder %s21, 0
      %p43 = por %p41, %p42
      %s44 = ssub.s32 %s15, %s22
      %p45 = scmp.eq.s32.totalorder %s44, 0
      %s47 = sadd.s32 %s46, 1
      %s48 = scalar_select %p45, %s46, %s47
      %p51 = pneg %p45
      %p52 = scmp.eq.s32.totalorder %s15, 1
      %p53 = por %p51, %p52
      %p54 = scmp.ne.s32.totalorder %s46, %s49
      %p55 = scmp.eq.s32.totalorder %s15, 0
      %p56 = por %p54, %p55
      %p57 = scmp.ne.s32.totalorder %s46, %s49
      %p58 = scmp.eq.s32.totalorder %s20, 1
      %p59 = por %p57, %p58
      %p60 = scmp.ne.s32.totalorder %s49, %s50
      %p61 = scmp.eq.s32.totalorder %s20, 0
      %p62 = por %p60, %p61
      %p63 = scmp.ne.s32.totalorder %s49, %s50
      %p64 = scmp.eq.s32.totalorder %s21, 1
      %p65 = por %p63, %p64
      %p67 = scmp.ne.s32.totalorder %s50, %s66
      %p68 = scmp.eq.s32.totalorder %s21, 0
      %p69 = por %p67, %p68
      %s70 = ssub.s32 %s15, %s22
      %p71 = scmp.eq.s32.totalorder %s70, 0
      %s73 = sadd.s32 %s72, 1
      %s74 = scalar_select %p71, %s72, %s73
      %p77 = pneg %p71
      %p78 = scmp.eq.s32.totalorder %s15, 1
      %p79 = por %p77, %p78
      %p80 = scmp.ne.s32.totalorder %s72, %s75
      %p81 = scmp.eq.s32.totalorder %s15, 0
      %p82 = por %p80, %p81
      %p83 = scmp.ne.s32.totalorder %s72, %s75
      %p84 = scmp.eq.s32.totalorder %s20, 1
      %p85 = por %p83, %p84
      %p86 = scmp.ne.s32.totalorder %s75, %s76
      %p87 = scmp.eq.s32.totalorder %s20, 0
      %p88 = por %p86, %p87
      %p89 = scmp.ne.s32.totalorder %s75, %s76
      %p90 = scmp.eq.s32.totalorder %s21, 1
      %p91 = por %p89, %p90
      %p93 = scmp.ne.s32.totalorder %s76, %s92
      %p94 = scmp.eq.s32.totalorder %s21, 0
      %p95 = por %p93, %p94
      %p96 = scmp.le.s32.totalorder 1, %s15
      %p97 = scmp.lt.s32.totalorder %s15, 3
      %p98 = pnand %p96, %p97
      %p99 = pneg %p98
      // Predicated region
      $region9: #{tpu_custom_call.1} parent=5 // pred_check
        _
      $region10: #{tpu_custom_call.1} parent=5 // pred_check_branch
        %101 = sbr.rel (%p98) target = $region12
      $region11: #{tpu_custom_call.1} parent=5 // pred_region
        %s102 = ssub.s32 %s15, 1
        // Predicated region
        $region13: #{tpu_custom_call.1} parent=11 // pred_check
          %p103 = pneg %p36
        $region14: #{tpu_custom_call.1} parent=11 // pred_check_branch
          %105 = sbr.rel (%p103) target = $region16
        $region15: #{tpu_custom_call.1} parent=11 // pred_region
          %s107 = ssub.s32 64, 64
          %108 = vsyncadd [#allocation3], %s107
          %s110 = sshll.u32 [#allocation2], 4
          %s111 = int_to_ptr.vmem [resolvable:$true] %s110
          %113 = dma.hbm_to_vmem [thread:$0]  %s0, 64, %s111, [#allocation3]
        $region16: #{tpu_custom_call.1} parent=11 // pred_fallthru
          _
      $region12: #{tpu_custom_call.1} parent=5 // pred_fallthru
        _
      %p114 = scmp.lt.s32.totalorder %s15, 2
      // Predicated region
      $region17: #{tpu_custom_call.1} parent=5 // pred_check
        %p115 = pneg %p114
      $region18: #{tpu_custom_call.1} parent=5 // pred_check_branch
        %117 = sbr.rel (%p115) target = $region20
      $region19: #{tpu_custom_call.1} parent=5 // pred_region
        // Predicated region
        $region21: #{tpu_custom_call.1} parent=19 // pred_check
          %p118 = pneg %p56
        $region22: #{tpu_custom_call.1} parent=19 // pred_check_branch
          %120 = sbr.rel (%p118) target = $region24
        $region23: #{tpu_custom_call.1} parent=19 // pred_region
          %s121 = sand.u32 %s46, 1
          %s122 = scalar_lea.sflag [#allocation6], %s121
          %s123 = sand.u32 %s46, 1
          %s124 = smul.addr %s123, 32
          %s125 = scalar_lea.vmem [#allocation5], %s124
          %s127 = ssub.s32 512, 512
          %128 = vsyncadd %s122, %s127
          %s129 = smul.addr %s15, 64
          %s130 = scalar_lea.hbm %s1, %s129
          %s131 = sshll.u32 %s125, 4
          %s132 = int_to_ptr.vmem [resolvable:$true] %s131
          %137 = dma.hbm_to_vmem [thread:$0]  %s130, 512, %s132, %s122, 128, 64, 4
        $region24: #{tpu_custom_call.1} parent=19 // pred_fallthru
          _
      $region20: #{tpu_custom_call.1} parent=5 // pred_fallthru
        _
      %p138 = scmp.le.s32.totalorder 1, %s15
      %p139 = scmp.lt.s32.totalorder %s15, 3
      %p140 = pnand %p138, %p139
      %p141 = pneg %p140
      // Predicated region
      $region25: #{tpu_custom_call.1} parent=5 // pred_check
        _
      $region26: #{tpu_custom_call.1} parent=5 // pred_check_branch
        %143 = sbr.rel (%p140) target = $region28
      $region27: #{tpu_custom_call.1} parent=5 // pred_region
        %s144 = ssub.s32 %s15, 1
        // Predicated region
        $region29: #{tpu_custom_call.1} parent=27 // pred_check
          %p145 = pneg %p36
        $region30: #{tpu_custom_call.1} parent=27 // pred_check_branch
          %147 = sbr.rel (%p145) target = $region32
        $region31: #{tpu_custom_call.1} parent=27 // pred_region
          %148 = dma.done [#allocation3], 64
        $region32: #{tpu_custom_call.1} parent=27 // pred_fallthru
          _
        %s149 = sand.u32 %s49, 1
        %s150 = scalar_lea.sflag [#allocation6], %s149
        %s151 = sand.u32 %s49, 1
        %s152 = smul.addr %s151, 32
        %s153 = scalar_lea.vmem [#allocation5], %s152
        // Predicated region
        $region33: #{tpu_custom_call.1} parent=27 // pred_check
          %p154 = pneg %p62
        $region34: #{tpu_custom_call.1} parent=27 // pred_check_branch
          %156 = sbr.rel (%p154) target = $region36
        $region35: #{tpu_custom_call.1} parent=27 // pred_region
          %157 = dma.done %s150, 512
        $region36: #{tpu_custom_call.1} parent=27 // pred_fallthru
          _
        %p158 = pneg %p36
        %p159 = pneg %p33
        %s160 = sand.u32 %s49, 1
        %s161 = scalar_lea.sflag [#allocation6], %s160
        %s162 = sand.u32 %s49, 1
        %s163 = smul.addr %s162, 32
        %s164 = scalar_lea.vmem [#allocation5], %s163
        %p165 = pneg %p62
        %p166 = pneg %p59
        %p167 = pneg %p88
        %p168 = pneg %p85
        %s169 = sand.u32 %s75, 1
        %s170 = scalar_lea.sflag [#allocation4], %s169
        %s171 = sand.u32 %s75, 1
        %s172 = smul.addr %s171, 8
        %s173 = scalar_lea.vmem [#allocation7], %s172
        %v175 = vld [vmem:[#allocation2] sm:$0xf]
        %v176 = vld [vmem:[%s153] sm:$0xf]
        %v177 = vld [vmem:[%s153 + $0x4] sm:$0xf]
        %v178 = vld [vmem:[%s153 + $0x8] sm:$0xf]
        %v179 = vld [vmem:[%s153 + $0xc] sm:$0xf]
        %v180 = vld [vmem:[%s153 + $0x10] sm:$0xf]
        %v181 = vld [vmem:[%s153 + $0x14] sm:$0xf]
        %v182 = vld [vmem:[%s153 + $0x18] sm:$0xf]
        %v183 = vld [vmem:[%s153 + $0x1c] sm:$0xf]
        %v192 = vunpack.c.l.b16 %v176
        %v193 = vunpack.c.l.b16 %v177
        %v194 = vunpack.c.l.b16 %v178
        %v195 = vunpack.c.l.b16 %v179
        %v196 = vunpack.c.l.b16 %v180
        %v197 = vunpack.c.l.b16 %v181
        %v198 = vunpack.c.l.b16 %v182
        %v199 = vunpack.c.l.b16 %v183
        %v200 = vpack.c.b16 %v193, %v192
        %v201 = vpack.c.b16 %v195, %v194
        %v202 = vpack.c.b16 %v197, %v196
        %v203 = vpack.c.b16 %v199, %v198
        %vm208 = vcmask 523264
        %v210 = vsel %vm208, %v175, 0
        %212 = vmatprep.subr.bf16.mxu0 0
        %213 = vmatpush1.bf16.msra.mxu0 %v200
        %214 = vmatprep.subr.bf16.mxu0 0
        %215 = vmatpush1.bf16.msra.mxu0 %v201
        %216 = vmatprep.subr.bf16.mxu0 0
        %217 = vmatpush1.bf16.msra.mxu0 %v202
        %218 = vmatprep.subr.bf16.mxu0 0
        %219 = vmatpush1.bf16.msra.mxu0 %v203
        %220 = vmatprep.subr.bf16.mxu0 0
        %221 = vmatpush1.bf16.msra.mxu0 0
        %222 = vmatprep.subr.bf16.mxu0 0
        %223 = vmatpush1.bf16.msra.mxu0 0
        %224 = vmatprep.subr.bf16.mxu0 0
        %225 = vmatpush1.bf16.msra.mxu0 0
        %226 = vmatprep.subr.bf16.mxu0 0
        %227 = vmatpush1.bf16.msra.mxu0 0
        %228 = vmatprep.subr.bf16.mxu0 0
        %229 = vmatpush1.bf16.msra.mxu0 0
        %230 = vmatprep.subr.bf16.mxu0 0
        %231 = vmatpush1.bf16.msra.mxu0 0
        %232 = vmatprep.subr.bf16.mxu0 0
        %233 = vmatpush1.bf16.msra.mxu0 0
        %234 = vmatprep.subr.bf16.mxu0 0
        %235 = vmatpush1.bf16.msra.mxu0 0
        %236 = vmatprep.subr.bf16.mxu0 0
        %237 = vmatpush1.bf16.msra.mxu0 0
        %238 = vmatprep.subr.bf16.mxu0 0
        %239 = vmatpush1.bf16.msra.mxu0 0
        %240 = vmatprep.subr.bf16.mxu0 0
        %241 = vmatpush1.bf16.msra.mxu0 0
        %242 = vmatprep.subr.bf16.mxu0 0
        %243 = vmatpush1.bf16.msra.mxu0 0
        %244 = vmatprep.mubr.bf16.mxu0 0
        %245 = vmatmul.mubr.bf16.gmra.mrb[0].mxu0 %v210
        %v246 = vpop.f32.mrb[0].mxu0
        %v247 = vadd.f32 0.0, %v246
        %v248 = vpop.f32.mrb[0].mxu0
        %v249 = vpop.f32.mrb[0].mxu0
        %v250 = vpop.f32.mrb[0].mxu0
        %251 = vdwg.mxu0
        %v252 = vxor.u32 %v247, 2147483648
        %v253 = vmul.f32 %v252, 1.442695
        %v254 = vpow.pop %v253
        %v255 = vadd.f32 %v254, 1.0
        %v256 = vrcp.pop %v255
        %v257 = vmul.f32 1.0, %v256
        %258 = vst [vmem:[%s173] sm:$0xff] %v257
        %s259 = sand.u32 %s75, 1
        %s260 = scalar_lea.sflag [#allocation4], %s259
        %s261 = sand.u32 %s75, 1
        %s262 = smul.addr %s261, 8
        %s263 = scalar_lea.vmem [#allocation7], %s262
        // Predicated region
        $region37: #{tpu_custom_call.1} parent=27 // pred_check
          %p264 = pneg %p85
        $region38: #{tpu_custom_call.1} parent=27 // pred_check_branch
          %266 = sbr.rel (%p264) target = $region40
        $region39: #{tpu_custom_call.1} parent=27 // pred_region
          %s268 = ssub.s32 128, 128
          %269 = vsyncadd %s260, %s268
          %s270 = smul.addr %s20, 128
          %s271 = scalar_lea.hbm %s2, %s270
          %s273 = sshll.u32 %s263, 4
          %s274 = int_to_ptr.vmem [resolvable:$true] %s273
          %276 = dma.vmem_to_hbm [thread:$0]  %s274, 128, %s271, %s260
        $region40: #{tpu_custom_call.1} parent=27 // pred_fallthru
          _
      $region28: #{tpu_custom_call.1} parent=5 // pred_fallthru
        _
      %p277 = scmp.le.s32.totalorder 2, %s15
      // Predicated region
      $region41: #{tpu_custom_call.1} parent=5 // pred_check
        %p278 = pneg %p277
      $region42: #{tpu_custom_call.1} parent=5 // pred_check_branch
        %280 = sbr.rel (%p278) target = $region44
      $region43: #{tpu_custom_call.1} parent=5 // pred_region
        %s281 = ssub.s32 %s15, 2
        // Predicated region
        $region45: #{tpu_custom_call.1} parent=43 // pred_check
          %p282 = pneg %p91
        $region46: #{tpu_custom_call.1} parent=43 // pred_check_branch
          %284 = sbr.rel (%p282) target = $region48
        $region47: #{tpu_custom_call.1} parent=43 // pred_region
          %s285 = sand.u32 %s76, 1
          %s286 = scalar_lea.sflag [#allocation4], %s285
          %s287 = sand.u32 %s76, 1
          %s288 = smul.addr %s287, 8
          %s289 = scalar_lea.vmem [#allocation7], %s288
          %290 = dma.done %s286, 128
        $region48: #{tpu_custom_call.1} parent=43 // pred_fallthru
          _
      $region44: #{tpu_custom_call.1} parent=5 // pred_fallthru
        _
    $region6: #{tpu_custom_call.1} parent=1 // loop_footer
      %s19 = sadd.s32 1, %s15
    $region7: #{tpu_custom_call.1} parent=1 // loop_footer_branch
      %14 = sbr.rel target = $region3
    $region8: #{tpu_custom_call.1} parent=1 // loop_exit
      _
    %291 = vsyncpa [#allocation3], 1
    %s292 = scalar_lea.sflag [#allocation3], 1
    %293 = vsyncpa %s292, 1
    %294 = vsyncpa [#allocation6], 1
    %s295 = scalar_lea.sflag [#allocation6], 1
    %296 = vsyncpa %s295, 1
    %297 = vsyncpa [#allocation4], 1
    %s298 = scalar_lea.sflag [#allocation4], 1
    %299 = vsyncpa %s298, 1

</llo_original>
